<compile_context>
chip_gen: v7x
topology: tpu7x:2x2x1
jax: 0.10.0
libtpu: 0.0.40
codegen_flags: <defaults>
</compile_context>

<pallas_src>
import functools

import jax
import jax.numpy as jnp
from jax.experimental import pallas as pl
from jax.experimental.pallas import tpu as pltpu

LANE = 128


def dqn_kernel(x_ref, w12_ref, b12_ref, w3_ref, b3_ref, o_ref):
    """x_ref: [bt, 2*S] f32 (full observation tile); weights bf16/f32;
    biases f32; o_ref: [bt, A_pad] f32."""
    S = w12_ref.shape[0]
    # torch.split(observation, 1, dim=1)[0]: first S lanes of the flattened obs.
    x = x_ref[:, :S].astype(w12_ref.dtype)
    # state_embedder + obs_layer folded (exact), f32 accumulation on the MXU.
    h = jnp.dot(x, w12_ref[...], preferred_element_type=jnp.float32) + b12_ref[...]
    h = jnp.maximum(h, 0.0)                       # ReLU in f32 on the VPU
    # obs_layerout (columns zero-padded to a multiple of 128 -> lane-dense).
    h = h.astype(w3_ref.dtype)
    o_ref[...] = (
        jnp.dot(h, w3_ref[...], preferred_element_type=jnp.float32) + b3_ref[...]
    )


def init_raw_params(key, state_size, state_embedding_size, n_hidden, n_actions):
    """Per-layer params (torch.nn.Linear-style init). Weights stored [in, out]
    (transposed vs torch's [out, in]); biases [1, out]; all float32."""
    ks = jax.random.split(key, 6)

    def lin(kw, kb, fan_in, fan_out):
        bound = 1.0 / jnp.sqrt(fan_in)
        w = jax.random.uniform(kw, (fan_in, fan_out), jnp.float32, -bound, bound)
        b = jax.random.uniform(kb, (1, fan_out), jnp.float32, -bound, bound)
        return w, b

    w1, b1 = lin(ks[0], ks[1], state_size, state_embedding_size)
    w2, b2 = lin(ks[2], ks[3], state_embedding_size, n_hidden)
    w3, b3 = lin(ks[4], ks[5], n_hidden, n_actions)
    return (w1, b1, w2, b2, w3, b3)


def prepare_kernel_params(raw_params, compute_dtype=jnp.bfloat16):
    """Fold layer1 into layer2 (exact: no activation between them) and zero-pad
    the output projection to a lane-dense width (multiple of 128)."""
    w1, b1, w2, b2, w3, b3 = raw_params
    w12 = w1 @ w2                                  # [S, H]
    b12 = b1 @ w2 + b2                             # [1, H]
    n_hidden, n_actions = w3.shape
    a_pad = ((n_actions + LANE - 1) // LANE) * LANE
    w3p = jnp.zeros((n_hidden, a_pad), jnp.float32).at[:, :n_actions].set(w3)
    b3p = jnp.zeros((1, a_pad), jnp.float32).at[:, :n_actions].set(b3)
    return (
        w12.astype(compute_dtype),
        b12.astype(jnp.float32),
        w3p.astype(compute_dtype),
        b3p.astype(jnp.float32),
    )


@functools.partial(jax.jit, static_argnames=("n_actions", "b_tile"))
def dqn_forward(observation, kernel_params, *, n_actions, b_tile=1024):
    """observation: [B, 2, state_size] f32 -> [B, 1, n_actions] f32.

    Note: for tiny online-acting batches (B ~ 1-8) a plain jnp path would beat
    any pallas_call on fixed overhead alone; this kernel targets training-size
    batches.  The demo below still runs the kernel to exercise it.
    """
    w12, b12, w3p, b3p = kernel_params
    B, two, S = observation.shape
    assert two == 2
    a_pad = w3p.shape[1]

    # Fold torch.split's chunk axis into the lane axis (free contiguous
    # reshape); the kernel slices the first S lanes, so no extra XLA slice op
    # or HBM round trip is needed.
    obs2d = observation.reshape(B, 2 * S)

    bt = min(b_tile, B)
    num_tiles = pl.cdiv(B, bt)
    Bp = num_tiles * bt
    if Bp != B:  # pad batch so the grid divides evenly; sliced off below
        obs2d = jnp.pad(obs2d, ((0, Bp - B), (0, 0)))

    out = pl.pallas_call(
        dqn_kernel,
        out_shape=jax.ShapeDtypeStruct((Bp, a_pad), jnp.float32),
        grid=(num_tiles,),
        in_specs=[
            pl.BlockSpec((bt, 2 * S), lambda i: (i, 0)),   # activations: batch-tiled
            pl.BlockSpec(w12.shape, lambda i: (0, 0)),     # weights: VMEM-resident
            pl.BlockSpec(b12.shape, lambda i: (0, 0)),
            pl.BlockSpec(w3p.shape, lambda i: (0, 0)),
            pl.BlockSpec(b3p.shape, lambda i: (0, 0)),
        ],
        out_specs=pl.BlockSpec((bt, a_pad), lambda i: (i, 0)),
        compiler_params=pltpu.CompilerParams(
            dimension_semantics=("parallel",),             # v7x: shard batch over 2 TCs
        ),
    )(obs2d, w12, b12, w3p, b3p)

    # Drop batch/lane padding; restore the singleton dim kept by torch.split.
    return out[:B, None, :n_actions]


def reference_forward(observation, raw_params):
    """Pure-jnp f32 reference matching the PyTorch module exactly."""
    w1, b1, w2, b2, w3, b3 = raw_params
    state = observation[:, 0:1, :]
    h = state @ w1 + b1
    h = jnp.maximum(h @ w2 + b2, 0.0)
    return h @ w3 + b3


if __name__ == "__main__":
    batch = 2
    state_size = 16
    state_embedding_size = 32
    n_hidden = 32
    n_actions = 4

    key = jax.random.PRNGKey(0)
    k_obs, k_par = jax.random.split(key)
    observation = jax.random.normal(k_obs, (batch, 2, state_size), jnp.float32)
    raw_params = init_raw_params(
        k_par, state_size, state_embedding_size, n_hidden, n_actions
    )

    with jax.default_matmul_precision("highest"):
        ref = reference_forward(observation, raw_params)

    # f32 compute path: validates the fold / in-kernel split / lane padding.
    p_f32 = prepare_kernel_params(raw_params, compute_dtype=jnp.float32)
    out_f32 = jax.block_until_ready(
        dqn_forward(observation, p_f32, n_actions=n_actions)
    )
    assert out_f32.shape == (batch, 1, n_actions)
    assert jnp.allclose(out_f32, ref, atol=2e-2, rtol=2e-2)

    # bf16 compute path (default perf configuration): single-pass MXU.
    p_bf16 = prepare_kernel_params(raw_params, compute_dtype=jnp.bfloat16)
    out_bf16 = jax.block_until_ready(
        dqn_forward(observation, p_bf16, n_actions=n_actions)
    )
    assert out_bf16.shape == (batch, 1, n_actions)
    assert jnp.allclose(out_bf16, ref, atol=5e-2, rtol=5e-2)

    print("KERNEL_OK")
</pallas_src>

<mosaic_0001>
module attributes {stable_mosaic.version = 11 : i64} {
  func.func @dqn_kernel(%arg0: i32, %arg1: memref<2x32xf32, #tpu.memory_space<vmem>>, %arg2: memref<16x32xf32, #tpu.memory_space<vmem>>, %arg3: memref<1x32xf32, #tpu.memory_space<vmem>>, %arg4: memref<32x128xf32, #tpu.memory_space<vmem>>, %arg5: memref<1x128xf32, #tpu.memory_space<vmem>>, %arg6: memref<2x128xf32, #tpu.memory_space<vmem>>) attributes {dimension_semantics = [#tpu.dimension_semantics<parallel>], iteration_bounds = array<i64: 1>, scalar_prefetch = 0 : i64, scratch_operands = 0 : i64, tpu.core_type = #tpu.core_type<tc>, window_params = [{transform_indices = @transform_0, window_bounds = array<i64: 2, 32>}, {pipeline_mode = #tpu.pipeline_mode<synchronous>, transform_indices = @transform_1, window_bounds = array<i64: 16, 32>}, {pipeline_mode = #tpu.pipeline_mode<synchronous>, transform_indices = @transform_2, window_bounds = array<i64: 1, 32>}, {pipeline_mode = #tpu.pipeline_mode<synchronous>, transform_indices = @transform_3, window_bounds = array<i64: 32, 128>}, {pipeline_mode = #tpu.pipeline_mode<synchronous>, transform_indices = @transform_4, window_bounds = array<i64: 1, 128>}, {transform_indices = @transform_5, window_bounds = array<i64: 2, 128>}]} {
    %c0 = arith.constant 0 : index
    %c0_0 = arith.constant 0 : index
    %0 = vector.load %arg1[%c0, %c0_0] : memref<2x32xf32, #tpu.memory_space<vmem>>, vector<2x16xf32>
    %c0_1 = arith.constant 0 : index
    %c0_2 = arith.constant 0 : index
    %1 = vector.load %arg2[%c0_1, %c0_2] : memref<16x32xf32, #tpu.memory_space<vmem>>, vector<16x32xf32>
    %cst = arith.constant dense<0.000000e+00> : vector<2x32xf32>
    %2 = tpu.matmul %0, %1, %cst {dimension_numbers = #tpu.dot_dimension_numbers<[1], [0], [0], [1], [0, 0, 1, 1], [], []>} : vector<2x16xf32>, vector<16x32xf32>, vector<2x32xf32> -> vector<2x32xf32>
    %c0_3 = arith.constant 0 : index
    %c0_4 = arith.constant 0 : index
    %3 = vector.load %arg3[%c0_3, %c0_4] : memref<1x32xf32, #tpu.memory_space<vmem>>, vector<1x32xf32>
    %4 = vector.broadcast %3 : vector<1x32xf32> to vector<2x32xf32>
    %5 = arith.addf %2, %4 : vector<2x32xf32>
    %cst_5 = arith.constant 0.000000e+00 : f32
    %6 = vector.broadcast %cst_5 : f32 to vector<2x32xf32>
    %7 = arith.maximumf %5, %6 : vector<2x32xf32>
    %c0_6 = arith.constant 0 : index
    %c0_7 = arith.constant 0 : index
    %8 = vector.load %arg4[%c0_6, %c0_7] : memref<32x128xf32, #tpu.memory_space<vmem>>, vector<32x128xf32>
    %cst_8 = arith.constant dense<0.000000e+00> : vector<2x128xf32>
    %9 = tpu.matmul %7, %8, %cst_8 {dimension_numbers = #tpu.dot_dimension_numbers<[1], [0], [0], [1], [0, 0, 1, 1], [], []>} : vector<2x32xf32>, vector<32x128xf32>, vector<2x128xf32> -> vector<2x128xf32>
    %c0_9 = arith.constant 0 : index
    %c0_10 = arith.constant 0 : index
    %10 = vector.load %arg5[%c0_9, %c0_10] : memref<1x128xf32, #tpu.memory_space<vmem>>, vector<1x128xf32>
    %11 = vector.broadcast %10 : vector<1x128xf32> to vector<2x128xf32>
    %12 = arith.addf %9, %11 : vector<2x128xf32>
    %c0_11 = arith.constant 0 : index
    %c0_12 = arith.constant 0 : index
    %13 = vector.load %arg6[%c0_11, %c0_12] : memref<2x128xf32, #tpu.memory_space<vmem>>, vector<2x128xf32>
    tpu.vector_store %arg6[%c0_11, %c0_12], %12 {strides = array<i32>} : memref<2x128xf32, #tpu.memory_space<vmem>>, vector<2x128xf32>,
    return
  }
  func.func @transform_0(%arg0: i32) -> (i32, i32) {
    %c0_i32 = arith.constant 0 : i32
    %c0_i32_0 = arith.constant 0 : i32
    return %arg0, %c0_i32 : i32, i32
  }
  func.func @transform_1(%arg0: i32) -> (i32, i32) {
    %c0_i32 = arith.constant 0 : i32
    %c0_i32_0 = arith.constant 0 : i32
    %c0_i32_1 = arith.constant 0 : i32
    return %c0_i32, %c0_i32_0 : i32, i32
  }
  func.func @transform_2(%arg0: i32) -> (i32, i32) {
    %c0_i32 = arith.constant 0 : i32
    %c0_i32_0 = arith.constant 0 : i32
    %c0_i32_1 = arith.constant 0 : i32
    return %c0_i32, %c0_i32_0 : i32, i32
  }
  func.func @transform_3(%arg0: i32) -> (i32, i32) {
    %c0_i32 = arith.constant 0 : i32
    %c0_i32_0 = arith.constant 0 : i32
    %c0_i32_1 = arith.constant 0 : i32
    return %c0_i32, %c0_i32_0 : i32, i32
  }
  func.func @transform_4(%arg0: i32) -> (i32, i32) {
    %c0_i32 = arith.constant 0 : i32
    %c0_i32_0 = arith.constant 0 : i32
    %c0_i32_1 = arith.constant 0 : i32
    return %c0_i32, %c0_i32_0 : i32, i32
  }
  func.func @transform_5(%arg0: i32) -> (i32, i32) {
    %c0_i32 = arith.constant 0 : i32
    %c0_i32_0 = arith.constant 0 : i32
    return %arg0, %c0_i32 : i32, i32
  }
}

</mosaic_0001>

<llo_original>
// kernel: dqn_forward.1
$region0: #{dqn_forward.1}
  #allocation0 [shape = 'u32[]', space=smem, size = 0x4, offset = 0x4, fixed_abs, tag = 'smem constant byte address 0x4 - core index']
  #allocation1 [shape = 'u32[144,128]{1,0:T(1,128)}', space=vmem, size = 0x12000, scoped, tag = 'internal scratch']
  %s0 = inlined_call_operand.vmem [shape: f32[2,32], index: 0, kind: input, shape index: {}]
  %s1 = inlined_call_operand.hbm [shape: f32[16,32], index: 1, kind: input, shape index: {}]
  %s2 = inlined_call_operand.vmem [shape: f32[1,32], index: 2, kind: input, shape index: {}]
  %s3 = inlined_call_operand.hbm [shape: f32[32,128], index: 3, kind: input, shape index: {}]
  %s4 = inlined_call_operand.vmem [shape: f32[1,128], index: 4, kind: input, shape index: {}]
  %s5 = inlined_call_operand.hbm [shape: f32[2,128], index: 5, kind: output, shape index: {}]
  %s6 = sld [smem:[#allocation0]]
  $region38: #{dqn_forward.1} parent=0
    _
  %s8 = ssub.s32 1, %s6
  %s9 = scalar_select 0, %s8, %s6
  $region1: #{dqn_forward.1} parent=0
    #allocation2 [shape = 'u8[8192]{0}', space=vmem, size = 0x2000, scoped, tag = 'input window, operand 1, single buffered']
    #allocation3 [shape = 's32[1]{0}', space=sflag, size = 0x4, scoped, tag = 'scoped memory for dqn_forward.1']
    #allocation4 [shape = 's32[1]{0}', space=sflag, size = 0x4, scoped, tag = 'scoped memory for dqn_forward.1']
    #allocation5 [shape = 'u8[16384]{0}', space=vmem, size = 0x4000, scoped, tag = 'input window, operand 3, single buffered']
    #allocation6 [shape = 's32[1]{0}', space=sflag, size = 0x4, scoped, tag = 'scoped memory for dqn_forward.1']
    #allocation7 [shape = 'u8[1024]{0}', space=vmem, size = 0x400, scoped, tag = 'output window, operand 0, single buffered']
    %10 = vsyncpa [#allocation3], 0
    %11 = vsyncpa [#allocation6], 0
    %12 = vsyncpa [#allocation4], 0
    // Predicated region
    $region2: #{dqn_forward.1} parent=1 // pred_check
      _
    $region3: #{dqn_forward.1} parent=1 // pred_check_branch
      %14 = sbr.rel (0) target = $region5
    $region4: #{dqn_forward.1} parent=1 // pred_region
      _
    $region5: #{dqn_forward.1} parent=1 // pred_fallthru
      _
    // Predicated region
    $region6: #{dqn_forward.1} parent=1 // pred_check
      _
    $region7: #{dqn_forward.1} parent=1 // pred_check_branch
      %16 = sbr.rel (0) target = $region9
    $region8: #{dqn_forward.1} parent=1 // pred_region
      %s18 = ssub.s32 256, 256
      %19 = vsyncadd [#allocation3], %s18
      %s20 = sshll.u32 [#allocation2], 4
      %s21 = int_to_ptr.vmem [resolvable:$true] %s20
      %26 = dma.hbm_to_vmem [thread:$0]  %s1, 256, %s21, [#allocation3], 128, 128, 8
    $region9: #{dqn_forward.1} parent=1 // pred_fallthru
      _
    // Predicated region
    $region10: #{dqn_forward.1} parent=1 // pred_check
      _
    $region11: #{dqn_forward.1} parent=1 // pred_check_branch
      %28 = sbr.rel (0) target = $region13
    $region12: #{dqn_forward.1} parent=1 // pred_region
      _
    $region13: #{dqn_forward.1} parent=1 // pred_fallthru
      _
    // Predicated region
    $region14: #{dqn_forward.1} parent=1 // pred_check
      _
    $region15: #{dqn_forward.1} parent=1 // pred_check_branch
      %30 = sbr.rel (0) target = $region17
    $region16: #{dqn_forward.1} parent=1 // pred_region
      %s32 = ssub.s32 512, 512
      %33 = vsyncadd [#allocation6], %s32
      %s34 = sshll.u32 [#allocation5], 4
      %s35 = int_to_ptr.vmem [resolvable:$true] %s34
      %40 = dma.hbm_to_vmem [thread:$0]  %s3, 512, %s35, [#allocation6], 128, 128, 8
    $region17: #{dqn_forward.1} parent=1 // pred_fallthru
      _
    // Predicated region
    $region18: #{dqn_forward.1} parent=1 // pred_check
      _
    $region19: #{dqn_forward.1} parent=1 // pred_check_branch
      %42 = sbr.rel (0) target = $region21
    $region20: #{dqn_forward.1} parent=1 // pred_region
      _
    $region21: #{dqn_forward.1} parent=1 // pred_fallthru
      _
    // Predicated region
    $region22: #{dqn_forward.1} parent=1 // pred_check
      _
    $region23: #{dqn_forward.1} parent=1 // pred_check_branch
      %44 = sbr.rel (0) target = $region25
    $region24: #{dqn_forward.1} parent=1 // pred_region
      %45 = dma.done [#allocation3], 256
    $region25: #{dqn_forward.1} parent=1 // pred_fallthru
      _
    // Predicated region
    $region26: #{dqn_forward.1} parent=1 // pred_check
      _
    $region27: #{dqn_forward.1} parent=1 // pred_check_branch
      %47 = sbr.rel (0) target = $region29
    $region28: #{dqn_forward.1} parent=1 // pred_region
      %48 = dma.done [#allocation6], 512
    $region29: #{dqn_forward.1} parent=1 // pred_fallthru
      _
    %v49 = vld [vmem:[%s0] sm:$0x3]
    %v50 = vld [vmem:[#allocation2] sm:$0xff]
    %v51 = vld [vmem:[#allocation2 + $0x8] sm:$0xff]
    %v52 = vld [vmem:[%s2] sm:$0x1]
    %v54 = vlaneseq
    %v55 = vshrl.u32 %v54, 7
    %v56 = vsub.s32 0, %v55
    %v57 = vrot.slane %v52, %v56
    %vm59 = vcmask 130048
    %v61 = vsel %vm59, %v49, 0
    %63 = vmatprep.subr.mxu0 0.0
    %64 = vmatpush1.msra.mxu0 %v50
    %65 = vmatprep.subr.mxu0 0.0
    %66 = vmatpush1.msra.mxu0 %v51
    %67 = vmatprep.subr.mxu0 0.0
    %68 = vmatpush1.msra.mxu0 0.0
    %69 = vmatprep.subr.mxu0 0.0
    %70 = vmatpush1.msra.mxu0 0.0
    %71 = vmatprep.subr.mxu0 0.0
    %72 = vmatpush1.msra.mxu0 0.0
    %73 = vmatprep.subr.mxu0 0.0
    %74 = vmatpush1.msra.mxu0 0.0
    %75 = vmatprep.subr.mxu0 0.0
    %76 = vmatpush1.msra.mxu0 0.0
    %77 = vmatprep.subr.mxu0 0.0
    %78 = vmatpush1.msra.mxu0 0.0
    %79 = vmatprep.subr.mxu0 0.0
    %80 = vmatpush1.msra.mxu0 0.0
    %81 = vmatprep.subr.mxu0 0.0
    %82 = vmatpush1.msra.mxu0 0.0
    %83 = vmatprep.subr.mxu0 0.0
    %84 = vmatpush1.msra.mxu0 0.0
    %85 = vmatprep.subr.mxu0 0.0
    %86 = vmatpush1.msra.mxu0 0.0
    %87 = vmatprep.subr.mxu0 0.0
    %88 = vmatpush1.msra.mxu0 0.0
    %89 = vmatprep.subr.mxu0 0.0
    %90 = vmatpush1.msra.mxu0 0.0
    %91 = vmatprep.subr.mxu0 0.0
    %92 = vmatpush1.msra.mxu0 0.0
    %93 = vmatprep.subr.mxu0 0.0
    %94 = vmatpush1.msra.mxu0 0.0
    %95 = vmatprep.subr.mxu0 0.0
    %96 = vmatpush1.msra.mxu0 0.0
    %97 = vmatprep.subr.mxu0 0.0
    %98 = vmatpush1.msra.mxu0 0.0
    %99 = vmatprep.subr.mxu0 0.0
    %100 = vmatpush1.msra.mxu0 0.0
    %101 = vmatprep.subr.mxu0 0.0
    %102 = vmatpush1.msra.mxu0 0.0
    %103 = vmatprep.subr.mxu0 0.0
    %104 = vmatpush1.msra.mxu0 0.0
    %105 = vmatprep.subr.mxu0 0.0
    %106 = vmatpush1.msra.mxu0 0.0
    %107 = vmatprep.subr.mxu0 0.0
    %108 = vmatpush1.msra.mxu0 0.0
    %109 = vmatprep.subr.mxu0 0.0
    %110 = vmatpush1.msra.mxu0 0.0
    %111 = vmatprep.subr.mxu0 0.0
    %112 = vmatpush1.msra.mxu0 0.0
    %113 = vmatprep.subr.mxu0 0.0
    %114 = vmatpush1.msra.mxu0 0.0
    %115 = vmatprep.subr.mxu0 0.0
    %116 = vmatpush1.msra.mxu0 0.0
    %117 = vmatprep.subr.mxu0 0.0
    %118 = vmatpush1.msra.mxu0 0.0
    %119 = vmatprep.subr.mxu0 0.0
    %120 = vmatpush1.msra.mxu0 0.0
    %121 = vmatprep.subr.mxu0 0.0
    %122 = vmatpush1.msra.mxu0 0.0
    %123 = vmatprep.subr.mxu0 0.0
    %124 = vmatpush1.msra.mxu0 0.0
    %125 = vmatprep.subr.mxu0 0.0
    %126 = vmatpush1.msra.mxu0 0.0
    %127 = vmatprep.mubr.f32.mxu0 0.0
    %128 = vmatmul.mubr.f32.gmra.mrb[0].mxu0 %v61
    %v129 = vpop.f32.mrb[0].mxu0
    %v130 = vadd.f32 %v57, %v129
    %v131 = vpop.f32.mrb[0].mxu0
    %132 = vdwg.mxu0
    %v133 = vmax.f32 %v130, 0.0
    %v134 = vld [vmem:[#allocation5] sm:$0xff]
    %v135 = vld [vmem:[#allocation5 + $0x8] sm:$0xff]
    %v136 = vld [vmem:[#allocation5 + $0x10] sm:$0xff]
    %v137 = vld [vmem:[#allocation5 + $0x18] sm:$0xff]
    %v138 = vld [vmem:[%s4] sm:$0x1]
    %v140 = vlaneseq
    %v141 = vshrl.u32 %v140, 7
    %v142 = vsub.s32 0, %v141
    %v143 = vrot.slane %v138, %v142
    %vm145 = vcmask 261120
    %v147 = vsel %vm145, %v133, 0
    %149 = vmatprep.subr.mxu0 0.0
    %150 = vmatpush1.msra.mxu0 %v134
    %151 = vmatprep.subr.mxu0 0.0
    %152 = vmatpush1.msra.mxu0 %v135
    %153 = vmatprep.subr.mxu0 0.0
    %154 = vmatpush1.msra.mxu0 %v136
    %155 = vmatprep.subr.mxu0 0.0
    %156 = vmatpush1.msra.mxu0 %v137
    %157 = vmatprep.subr.mxu0 0.0
    %158 = vmatpush1.msra.mxu0 0.0
    %159 = vmatprep.subr.mxu0 0.0
    %160 = vmatpush1.msra.mxu0 0.0
    %161 = vmatprep.subr.mxu0 0.0
    %162 = vmatpush1.msra.mxu0 0.0
    %163 = vmatprep.subr.mxu0 0.0
    %164 = vmatpush1.msra.mxu0 0.0
    %165 = vmatprep.subr.mxu0 0.0
    %166 = vmatpush1.msra.mxu0 0.0
    %167 = vmatprep.subr.mxu0 0.0
    %168 = vmatpush1.msra.mxu0 0.0
    %169 = vmatprep.subr.mxu0 0.0
    %170 = vmatpush1.msra.mxu0 0.0
    %171 = vmatprep.subr.mxu0 0.0
    %172 = vmatpush1.msra.mxu0 0.0
    %173 = vmatprep.subr.mxu0 0.0
    %174 = vmatpush1.msra.mxu0 0.0
    %175 = vmatprep.subr.mxu0 0.0
    %176 = vmatpush1.msra.mxu0 0.0
    %177 = vmatprep.subr.mxu0 0.0
    %178 = vmatpush1.msra.mxu0 0.0
    %179 = vmatprep.subr.mxu0 0.0
    %180 = vmatpush1.msra.mxu0 0.0
    %181 = vmatprep.subr.mxu0 0.0
    %182 = vmatpush1.msra.mxu0 0.0
    %183 = vmatprep.subr.mxu0 0.0
    %184 = vmatpush1.msra.mxu0 0.0
    %185 = vmatprep.subr.mxu0 0.0
    %186 = vmatpush1.msra.mxu0 0.0
    %187 = vmatprep.subr.mxu0 0.0
    %188 = vmatpush1.msra.mxu0 0.0
    %189 = vmatprep.subr.mxu0 0.0
    %190 = vmatpush1.msra.mxu0 0.0
    %191 = vmatprep.subr.mxu0 0.0
    %192 = vmatpush1.msra.mxu0 0.0
    %193 = vmatprep.subr.mxu0 0.0
    %194 = vmatpush1.msra.mxu0 0.0
    %195 = vmatprep.subr.mxu0 0.0
    %196 = vmatpush1.msra.mxu0 0.0
    %197 = vmatprep.subr.mxu0 0.0
    %198 = vmatpush1.msra.mxu0 0.0
    %199 = vmatprep.subr.mxu0 0.0
    %200 = vmatpush1.msra.mxu0 0.0
    %201 = vmatprep.subr.mxu0 0.0
    %202 = vmatpush1.msra.mxu0 0.0
    %203 = vmatprep.subr.mxu0 0.0
    %204 = vmatpush1.msra.mxu0 0.0
    %205 = vmatprep.subr.mxu0 0.0
    %206 = vmatpush1.msra.mxu0 0.0
    %207 = vmatprep.subr.mxu0 0.0
    %208 = vmatpush1.msra.mxu0 0.0
    %209 = vmatprep.subr.mxu0 0.0
    %210 = vmatpush1.msra.mxu0 0.0
    %211 = vmatprep.subr.mxu0 0.0
    %212 = vmatpush1.msra.mxu0 0.0
    %213 = vmatprep.mubr.f32.mxu0 0.0
    %214 = vmatmul.mubr.f32.gmra.mrb[0].mxu0 %v147
    %v215 = vpop.f32.mrb[0].mxu0
    %v216 = vadd.f32 %v143, %v215
    %v217 = vpop.f32.mrb[0].mxu0
    %218 = vdwg.mxu0
    %219 = vst [vmem:[#allocation7] sm:$0x3] %v216
    // Predicated region
    $region30: #{dqn_forward.1} parent=1 // pred_check
      _
    $region31: #{dqn_forward.1} parent=1 // pred_check_branch
      %221 = sbr.rel (0) target = $region33
    $region32: #{dqn_forward.1} parent=1 // pred_region
      %s223 = ssub.s32 32, 32
      %224 = vsyncadd [#allocation4], %s223
      %s226 = sshll.u32 [#allocation7], 4
      %s227 = int_to_ptr.vmem [resolvable:$true] %s226
      %229 = dma.vmem_to_hbm [thread:$0]  %s227, 32, %s5, [#allocation4]
    $region33: #{dqn_forward.1} parent=1 // pred_fallthru
      _
    // Predicated region
    $region34: #{dqn_forward.1} parent=1 // pred_check
      _
    $region35: #{dqn_forward.1} parent=1 // pred_check_branch
      %231 = sbr.rel (0) target = $region37
    $region36: #{dqn_forward.1} parent=1 // pred_region
      %232 = dma.done [#allocation4], 32
    $region37: #{dqn_forward.1} parent=1 // pred_fallthru
      _
    %233 = vsyncpa [#allocation3], 1
    %234 = vsyncpa [#allocation6], 1
    %235 = vsyncpa [#allocation4], 1

</llo_original>
